<compile_context>
chip_gen: v7x
topology: tpu7x:2x2x1
jax: 0.10.0
libtpu: 0.0.40
codegen_flags: <defaults>
</compile_context>

<pallas_src>
import functools
import math

import jax
import jax.numpy as jnp
from jax.experimental import pallas as pl
from jax.experimental.pallas import tpu as pltpu


# --------------------------------------------------------------------------- #
# Kernel 1: per-head Q/K/V projection  (x @ W_h for every head h)             #
# --------------------------------------------------------------------------- #
def _proj_heads_kernel(x_ref, w_ref, out_ref):
    """x_ref: (1, TL, D); w_ref: (H, D, d_k); out_ref: (1, H, TL, d_k)."""
    x = x_ref[0]                                   # (TL, D)
    n_heads = w_ref.shape[0]
    for h in range(n_heads):                       # static unroll; weight resident once
        out_ref[0, h] = jnp.dot(
            x, w_ref[h], preferred_element_type=jnp.float32).astype(out_ref.dtype)


# --------------------------------------------------------------------------- #
# Kernel 2: flash attention (online softmax, streaming over kv tiles)         #
# --------------------------------------------------------------------------- #
def _flash_attn_kernel(q_ref, k_ref, v_ref, mask_ref, o_ref,
                       m_sc, l_sc, acc_sc,
                       *, kv_len, kv_len_padded, block_k, exact, bf16_exp):
    """grid = (B, H, num_q, num_kv); kv axis innermost / 'arbitrary'.

    q_ref    : (1, 1, TQ, d_k)   pre-scaled by 1/sqrt(d_k)
    k_ref    : (1, 1, TK, d_k)
    v_ref    : (1, 1, TK, d_k)
    mask_ref : (1, 1, TQ|1, TK|1) additive mask block (broadcasts)
    o_ref    : (1, 1, TQ, d_k)
    m_sc/l_sc: (TQ, 1) f32 ; acc_sc : (TQ, d_k) f32
    """
    ki = pl.program_id(3)

    @pl.when(ki == 0)
    def _():
        m_sc[...] = jnp.full_like(m_sc, -jnp.inf)
        l_sc[...] = jnp.zeros_like(l_sc)
        acc_sc[...] = jnp.zeros_like(acc_sc)

    q = q_ref[0, 0]                                # (TQ, d_k) compute dtype
    k = k_ref[0, 0]                                # (TK, d_k)
    v = v_ref[0, 0]                                # (TK, d_k)

    # scores: contraction on the last dim of both operands (no K transpose copy)
    s = jnp.einsum('qd,kd->qk', q, k, preferred_element_type=jnp.float32)  # (TQ, TK) f32
    s = s + mask_ref[0, 0].astype(jnp.float32)     # additive mask (broadcasts)

    if kv_len_padded != kv_len:                    # mask zero-padded key columns
        col = ki * block_k + jax.lax.broadcasted_iota(jnp.int32, s.shape, 1)
        s = jnp.where(col < kv_len, s, -1e30)

    m_prev = m_sc[...]                             # (TQ, 1)
    m_new = jnp.maximum(m_prev, jnp.max(s, axis=-1, keepdims=True))
    alpha = jnp.exp(m_prev - m_new)                # f32; exp(-inf)=0 on first block
    if bf16_exp:
        # bf16 EUP on v6e/v7x (~2x exp throughput); pass bf16_exp=False on v5e.
        p = jnp.exp((s - m_new).astype(jnp.bfloat16))
    else:
        p = jnp.exp(s - m_new)
    l_sc[...] = alpha * l_sc[...] + jnp.sum(p.astype(jnp.float32), axis=-1, keepdims=True)
    acc_sc[...] = alpha * acc_sc[...] + jnp.dot(
        p.astype(v.dtype), v, preferred_element_type=jnp.float32)
    m_sc[...] = m_new

    @pl.when(ki == pl.num_programs(3) - 1)
    def _():
        l = l_sc[...]
        if exact:
            inv = 1.0 / l
        else:
            inv = pl.reciprocal(l, approx=True)    # EUP slot; VPU stays free
        o_ref[0, 0] = (acc_sc[...] * inv).astype(o_ref.dtype)


# --------------------------------------------------------------------------- #
# Kernel 3: fc projection (implicit head merge) + residual + LayerNorm        #
# --------------------------------------------------------------------------- #
def _fc_out_ln_kernel(ctx_ref, res_ref, wfc_ref, gamma_ref, beta_ref, out_ref, *, eps):
    """ctx_ref: (1, H, TQ, d_k); res_ref: (1, TQ, D); wfc_ref: (H, d_k, D)."""
    n_heads = wfc_ref.shape[0]
    # sum over per-head row blocks of the fc weight == concat(heads) @ Wfc^T,
    # so the head merge happens inside the matmul reduction (no concat copy).
    x = jnp.dot(ctx_ref[0, 0], wfc_ref[0], preferred_element_type=jnp.float32)
    for h in range(1, n_heads):
        x = x + jnp.dot(ctx_ref[0, h], wfc_ref[h], preferred_element_type=jnp.float32)

    # dropout(x) == identity (eval / p = 0.0); residual in the ORIGINAL precision.
    y = res_ref[0].astype(jnp.float32) + x
    mean = jnp.mean(y, axis=-1, keepdims=True)
    yc = y - mean
    var = jnp.mean(yc * yc, axis=-1, keepdims=True)        # biased variance
    y_norm = yc * jax.lax.rsqrt(var + eps)
    out_ref[0] = (y_norm * gamma_ref[0] + beta_ref[0]).astype(out_ref.dtype)


# --------------------------------------------------------------------------- #
# Wrapper                                                                     #
# --------------------------------------------------------------------------- #
def _ceil_to(x, m):
    return ((x + m - 1) // m) * m


def _pad_axis(x, new_size, axis):
    pad = new_size - x.shape[axis]
    if pad == 0:
        return x
    widths = [(0, 0)] * x.ndim
    widths[axis] = (0, pad)
    return jnp.pad(x, widths)


def _project_heads(x, w_heads, tile, vmem_limit_bytes):
    """x: (B, L, D) compute dtype (L % tile == 0); w_heads: (H, D, d_k)."""
    B, L, D = x.shape
    H, _, d_k = w_heads.shape
    return pl.pallas_call(
        _proj_heads_kernel,
        out_shape=jax.ShapeDtypeStruct((B, H, L, d_k), w_heads.dtype),
        grid_spec=pltpu.PrefetchScalarGridSpec(
            num_scalar_prefetch=0,
            grid=(B, L // tile),
            in_specs=[
                pl.BlockSpec((1, tile, D), lambda b, li: (b, li, 0)),
                pl.BlockSpec((H, D, d_k), lambda b, li: (0, 0, 0)),   # resident weights
            ],
            out_specs=pl.BlockSpec((1, H, tile, d_k), lambda b, li: (b, 0, li, 0)),
        ),
        compiler_params=pltpu.CompilerParams(
            dimension_semantics=("parallel", "parallel"),
            vmem_limit_bytes=vmem_limit_bytes),
    )(x, w_heads)


def multi_headed_attention(query, key, value, mask,
                           w_q, w_k, w_v, w_fc, gamma, beta,
                           *, n_heads, eps=1e-6,
                           compute_dtype=jnp.bfloat16,
                           block_q=512, block_k=512,
                           bf16_exp=None,
                           vmem_limit_bytes=64 * 1024 * 1024):
    """query/key/value: (B, L, D); mask: additive, broadcastable to (B, H, Lq, Lk).
    w_* are PyTorch-style (out, in) Linear weights (no biases)."""
    B, Lq, D = query.shape
    Lk = key.shape[1]
    Lv = value.shape[1]
    assert D % n_heads == 0
    assert Lk == Lv, "attention requires len_k == len_v"
    assert block_q % 8 == 0 and block_k % 128 == 0
    d_k = D // n_heads

    Mb, Mh, Mq, Mk = mask.shape
    assert Mb in (1, B) and Mh in (1, n_heads), "mask batch/head dims must be 1 or full"
    assert Mq in (1, Lq) and Mk in (1, Lk), "mask seq dims must be 1 or full"

    out_dtype = query.dtype
    high_precision = jnp.dtype(compute_dtype) == jnp.dtype(jnp.float32)
    use_bf16_exp = (not high_precision) if bf16_exp is None else bf16_exp

    # ---- tile sizes / padded lengths (ragged seq lens handled by zero padding) ----
    TQ = min(block_q, _ceil_to(Lq, 8))
    TK = min(block_k, _ceil_to(Lk, 8))
    Lq_pad = _ceil_to(Lq, TQ)
    Lk_pad = _ceil_to(Lk, TK)
    num_q = Lq_pad // TQ
    num_k = Lk_pad // TK

    # ---- one-time glue in the wrapper (cheap, outside the kernels) ----
    inv_temp = 1.0 / math.sqrt(float(d_k))
    # PyTorch Linear weights are (out, in); build per-head layouts.
    wq_h = (w_q.T * inv_temp).reshape(D, n_heads, d_k).transpose(1, 0, 2).astype(compute_dtype)
    wk_h = w_k.T.reshape(D, n_heads, d_k).transpose(1, 0, 2).astype(compute_dtype)
    wv_h = w_v.T.reshape(D, n_heads, d_k).transpose(1, 0, 2).astype(compute_dtype)
    wfc_h = w_fc.T.reshape(n_heads, d_k, D).astype(compute_dtype)
    gamma2 = gamma.reshape(1, D).astype(jnp.float32)
    beta2 = beta.reshape(1, D).astype(jnp.float32)

    q_c = _pad_axis(query.astype(compute_dtype), Lq_pad, 1)
    k_c = _pad_axis(key.astype(compute_dtype), Lk_pad, 1)
    v_c = _pad_axis(value.astype(compute_dtype), Lk_pad, 1)
    residual = _pad_axis(query, Lq_pad, 1)              # original-precision residual

    mask_c = mask.astype(compute_dtype)                 # bf16 mask on the fast path
    if Mq == Lq:
        mask_c = _pad_axis(mask_c, Lq_pad, 2)
    if Mk == Lk:
        mask_c = _pad_axis(mask_c, Lk_pad, 3)
    mq_blk = TQ if Mq != 1 else 1
    mk_blk = TK if Mk != 1 else 1

    # ---- 1) Q/K/V projections into head-split layout (K/V projected exactly once) ----
    qh = _project_heads(q_c, wq_h, TQ, vmem_limit_bytes)     # (B, H, Lq_pad, d_k)
    kh = _project_heads(k_c, wk_h, TK, vmem_limit_bytes)     # (B, H, Lk_pad, d_k)
    vh = _project_heads(v_c, wv_h, TK, vmem_limit_bytes)     # (B, H, Lk_pad, d_k)

    # ---- 2) flash attention, streaming over kv tiles with online softmax ----
    def qo_map(b, h, qi, ki):
        return (b, h, qi, 0)

    def kv_map(b, h, qi, ki):
        return (b, h, ki, 0)

    def mask_map(b, h, qi, ki):
        return (b if Mb != 1 else 0, h if Mh != 1 else 0,
                qi if Mq != 1 else 0, ki if Mk != 1 else 0)

    attn_kernel = functools.partial(
        _flash_attn_kernel, kv_len=Lk, kv_len_padded=Lk_pad, block_k=TK,
        exact=high_precision, bf16_exp=use_bf16_exp)

    ctx = pl.pallas_call(
        attn_kernel,
        out_shape=jax.ShapeDtypeStruct((B, n_heads, Lq_pad, d_k), compute_dtype),
        grid_spec=pltpu.PrefetchScalarGridSpec(
            num_scalar_prefetch=0,
            grid=(B, n_heads, num_q, num_k),
            in_specs=[
                pl.BlockSpec((1, 1, TQ, d_k), qo_map),
                pl.BlockSpec((1, 1, TK, d_k), kv_map),
                pl.BlockSpec((1, 1, TK, d_k), kv_map),
                pl.BlockSpec((1, 1, mq_blk, mk_blk), mask_map),
            ],
            out_specs=pl.BlockSpec((1, 1, TQ, d_k), qo_map),
            scratch_shapes=[
                pltpu.VMEM((TQ, 1), jnp.float32),      # running max  m
                pltpu.VMEM((TQ, 1), jnp.float32),      # running sum  l
                pltpu.VMEM((TQ, d_k), jnp.float32),    # accumulator
            ],
        ),
        compiler_params=pltpu.CompilerParams(
            dimension_semantics=("parallel", "parallel", "parallel", "arbitrary"),
            vmem_limit_bytes=vmem_limit_bytes),
    )(qh, kh, vh, mask_c)

    # ---- 3) fc (per-head weight rows -> implicit head merge) + residual + LN ----
    out = pl.pallas_call(
        functools.partial(_fc_out_ln_kernel, eps=eps),
        out_shape=jax.ShapeDtypeStruct((B, Lq_pad, D), out_dtype),
        grid_spec=pltpu.PrefetchScalarGridSpec(
            num_scalar_prefetch=0,
            grid=(B, num_q),
            in_specs=[
                pl.BlockSpec((1, n_heads, TQ, d_k), lambda b, qi: (b, 0, qi, 0)),
                pl.BlockSpec((1, TQ, D), lambda b, qi: (b, qi, 0)),
                pl.BlockSpec((n_heads, d_k, D), lambda b, qi: (0, 0, 0)),
                pl.BlockSpec((1, D), lambda b, qi: (0, 0)),
                pl.BlockSpec((1, D), lambda b, qi: (0, 0)),
            ],
            out_specs=pl.BlockSpec((1, TQ, D), lambda b, qi: (b, qi, 0)),
        ),
        compiler_params=pltpu.CompilerParams(
            dimension_semantics=("parallel", "parallel"),
            vmem_limit_bytes=vmem_limit_bytes),
    )(ctx, residual, wfc_h, gamma2, beta2)

    if Lq_pad != Lq:
        out = out[:, :Lq]
    return out


# --------------------------------------------------------------------------- #
# Pure-JAX reference (mirrors the PyTorch forward, dropout = identity)        #
# --------------------------------------------------------------------------- #
def _reference(query, key, value, mask, w_q, w_k, w_v, w_fc, gamma, beta,
               *, n_heads, eps=1e-6):
    B, Lq, D = query.shape
    d_k = D // n_heads
    residual = query
    q = (query @ w_q.T).reshape(B, Lq, n_heads, d_k).transpose(0, 2, 1, 3)
    k = (key @ w_k.T).reshape(B, key.shape[1], n_heads, d_k).transpose(0, 2, 1, 3)
    v = (value @ w_v.T).reshape(B, value.shape[1], n_heads, d_k).transpose(0, 2, 1, 3)
    attn = jnp.einsum("bhqd,bhkd->bhqk", q, k) / math.sqrt(d_k) + mask
    p = jax.nn.softmax(attn, axis=-1)
    x = jnp.einsum("bhqk,bhkd->bhqd", p, v).transpose(0, 2, 1, 3).reshape(B, Lq, D)
    x = x @ w_fc.T
    y = residual + x
    mean = jnp.mean(y, axis=-1, keepdims=True)
    var = jnp.mean((y - mean) ** 2, axis=-1, keepdims=True)
    return (y - mean) / jnp.sqrt(var + eps) * gamma + beta


if __name__ == "__main__":
    # Small, module-consistent shapes: batch=2, seq=8, d_model=32, heads=4.
    B, L, D, H = 2, 8, 32, 4

    key0 = jax.random.PRNGKey(0)
    ks = jax.random.split(key0, 10)

    query = jax.random.normal(ks[0], (B, L, D), dtype=jnp.float32)
    keyt = jax.random.normal(ks[1], (B, L, D), dtype=jnp.float32)
    value = jax.random.normal(ks[2], (B, L, D), dtype=jnp.float32)

    # additive causal mask at its broadcastable shape (1, 1, L, L)
    causal = jnp.where(jnp.tril(jnp.ones((L, L), dtype=bool)), 0.0, -1e9)
    mask = causal.astype(jnp.float32)[None, None]

    # deterministic parameter init (PyTorch Linear weight shape: (out, in))
    scale = 1.0 / math.sqrt(D)
    w_q = jax.random.uniform(ks[3], (D, D), jnp.float32, -scale, scale)
    w_k = jax.random.uniform(ks[4], (D, D), jnp.float32, -scale, scale)
    w_v = jax.random.uniform(ks[5], (D, D), jnp.float32, -scale, scale)
    w_fc = jax.random.uniform(ks[6], (D, D), jnp.float32, -scale, scale)
    gamma = jnp.ones((D,), jnp.float32)     # LayerNorm weight
    beta = jnp.zeros((D,), jnp.float32)     # LayerNorm bias

    # TODO(synk): dropout implemented as identity (eval mode / p = 0.0)
    ref = _reference(query, keyt, value, mask,
                     w_q, w_k, w_v, w_fc, gamma, beta, n_heads=H)

    # 1) high-precision path (f32 operands, exact reciprocal, f32 exp)
    out_f32 = multi_headed_attention(query, keyt, value, mask,
                                     w_q, w_k, w_v, w_fc, gamma, beta,
                                     n_heads=H, compute_dtype=jnp.float32)
    out_f32 = jax.block_until_ready(out_f32)
    assert out_f32.shape == (B, L, D)
    assert jnp.allclose(out_f32, ref, atol=1e-3, rtol=1e-3), "f32 path mismatch vs reference"

    # 2) default fast path (bf16 operands/mask/exp, f32 accumulation/softmax-stats/LN)
    out_bf16 = multi_headed_attention(query, keyt, value, mask,
                                      w_q, w_k, w_v, w_fc, gamma, beta,
                                      n_heads=H)
    out_bf16 = jax.block_until_ready(out_bf16)
    assert out_bf16.shape == (B, L, D)
    assert jnp.allclose(out_bf16, ref, atol=5e-2, rtol=5e-2), "bf16 path mismatch vs reference"

    # 3) ragged sequence length (exercises zero-padding + in-kernel key masking)
    L2 = 12
    query2 = jax.random.normal(ks[7], (B, L2, D), dtype=jnp.float32)
    key2 = jax.random.normal(ks[8], (B, L2, D), dtype=jnp.float32)
    value2 = jax.random.normal(ks[9], (B, L2, D), dtype=jnp.float32)
    causal2 = jnp.where(jnp.tril(jnp.ones((L2, L2), dtype=bool)), 0.0, -1e9)
    mask2 = causal2.astype(jnp.float32)[None, None]
    ref2 = _reference(query2, key2, value2, mask2,
                      w_q, w_k, w_v, w_fc, gamma, beta, n_heads=H)
    out2 = multi_headed_attention(query2, key2, value2, mask2,
                                  w_q, w_k, w_v, w_fc, gamma, beta,
                                  n_heads=H, compute_dtype=jnp.float32)
    out2 = jax.block_until_ready(out2)
    assert out2.shape == (B, L2, D)
    assert jnp.allclose(out2, ref2, atol=1e-3, rtol=1e-3), "ragged-length path mismatch"

    print("KERNEL_OK")
</pallas_src>

<mosaic_0001>
module attributes {stable_mosaic.version = 11 : i64} {
  func.func @_proj_heads_kernel(%arg0: i32, %arg1: i32, %arg2: memref<1x8x32xf32, #tpu.memory_space<vmem>>, %arg3: memref<4x32x8xf32, #tpu.memory_space<vmem>>, %arg4: memref<1x4x8x8xf32, #tpu.memory_space<vmem>>) attributes {dimension_semantics = [#tpu.dimension_semantics<parallel>, #tpu.dimension_semantics<parallel>], iteration_bounds = array<i64: 2, 1>, scalar_prefetch = 0 : i64, scratch_operands = 0 : i64, tpu.core_type = #tpu.core_type<tc>, window_params = [{transform_indices = @transform_0, window_bounds = array<i64: 1, 8, 32>}, {pipeline_mode = #tpu.pipeline_mode<synchronous>, transform_indices = @transform_1, window_bounds = array<i64: 4, 32, 8>}, {transform_indices = @transform_2, window_bounds = array<i64: 1, 4, 8, 8>}]} {
    %c0 = arith.constant 0 : index
    %c0_0 = arith.constant 0 : index
    %c0_1 = arith.constant 0 : index
    %0 = vector.load %arg2[%c0, %c0_0, %c0_1] : memref<1x8x32xf32, #tpu.memory_space<vmem>>, vector<1x8x32xf32>
    %1 = vector.shape_cast %0 : vector<1x8x32xf32> to vector<8x32xf32>
    %c0_2 = arith.constant 0 : index
    %c0_3 = arith.constant 0 : index
    %c0_4 = arith.constant 0 : index
    %2 = vector.load %arg3[%c0_2, %c0_3, %c0_4] : memref<4x32x8xf32, #tpu.memory_space<vmem>>, vector<1x32x8xf32>
    %3 = vector.shape_cast %2 : vector<1x32x8xf32> to vector<32x8xf32>
    %cst = arith.constant dense<0.000000e+00> : vector<8x8xf32>
    %4 = tpu.matmul %1, %3, %cst {dimension_numbers = #tpu.dot_dimension_numbers<[1], [0], [0], [1], [0, 0, 1, 1], [], []>} : vector<8x32xf32>, vector<32x8xf32>, vector<8x8xf32> -> vector<8x8xf32>
    %c0_5 = arith.constant 0 : index
    %c0_6 = arith.constant 0 : index
    %c0_7 = arith.constant 0 : index
    %c0_8 = arith.constant 0 : index
    %5 = vector.load %arg4[%c0_5, %c0_6, %c0_7, %c0_8] : memref<1x4x8x8xf32, #tpu.memory_space<vmem>>, vector<1x1x8x8xf32>
    %6 = vector.shape_cast %5 : vector<1x1x8x8xf32> to vector<8x8xf32>
    %7 = vector.shape_cast %4 : vector<8x8xf32> to vector<1x1x8x8xf32>
    tpu.vector_store %arg4[%c0_5, %c0_6, %c0_7, %c0_8], %7 {strides = array<i32>} : memref<1x4x8x8xf32, #tpu.memory_space<vmem>>, vector<1x1x8x8xf32>,
    %c1 = arith.constant 1 : index
    %c0_9 = arith.constant 0 : index
    %c0_10 = arith.constant 0 : index
    %8 = vector.load %arg3[%c1, %c0_9, %c0_10] : memref<4x32x8xf32, #tpu.memory_space<vmem>>, vector<1x32x8xf32>
    %9 = vector.shape_cast %8 : vector<1x32x8xf32> to vector<32x8xf32>
    %cst_11 = arith.constant dense<0.000000e+00> : vector<8x8xf32>
    %10 = tpu.matmul %1, %9, %cst_11 {dimension_numbers = #tpu.dot_dimension_numbers<[1], [0], [0], [1], [0, 0, 1, 1], [], []>} : vector<8x32xf32>, vector<32x8xf32>, vector<8x8xf32> -> vector<8x8xf32>
    %c0_12 = arith.constant 0 : index
    %c1_13 = arith.constant 1 : index
    %c0_14 = arith.constant 0 : index
    %c0_15 = arith.constant 0 : index
    %11 = vector.load %arg4[%c0_12, %c1_13, %c0_14, %c0_15] : memref<1x4x8x8xf32, #tpu.memory_space<vmem>>, vector<1x1x8x8xf32>
    %12 = vector.shape_cast %11 : vector<1x1x8x8xf32> to vector<8x8xf32>
    %13 = vector.shape_cast %10 : vector<8x8xf32> to vector<1x1x8x8xf32>
    tpu.vector_store %arg4[%c0_12, %c1_13, %c0_14, %c0_15], %13 {strides = array<i32>} : memref<1x4x8x8xf32, #tpu.memory_space<vmem>>, vector<1x1x8x8xf32>,
    %c2 = arith.constant 2 : index
    %c0_16 = arith.constant 0 : index
    %c0_17 = arith.constant 0 : index
    %14 = vector.load %arg3[%c2, %c0_16, %c0_17] : memref<4x32x8xf32, #tpu.memory_space<vmem>>, vector<1x32x8xf32>
    %15 = vector.shape_cast %14 : vector<1x32x8xf32> to vector<32x8xf32>
    %cst_18 = arith.constant dense<0.000000e+00> : vector<8x8xf32>
    %16 = tpu.matmul %1, %15, %cst_18 {dimension_numbers = #tpu.dot_dimension_numbers<[1], [0], [0], [1], [0, 0, 1, 1], [], []>} : vector<8x32xf32>, vector<32x8xf32>, vector<8x8xf32> -> vector<8x8xf32>
    %c0_19 = arith.constant 0 : index
    %c2_20 = arith.constant 2 : index
    %c0_21 = arith.constant 0 : index
    %c0_22 = arith.constant 0 : index
    %17 = vector.load %arg4[%c0_19, %c2_20, %c0_21, %c0_22] : memref<1x4x8x8xf32, #tpu.memory_space<vmem>>, vector<1x1x8x8xf32>
    %18 = vector.shape_cast %17 : vector<1x1x8x8xf32> to vector<8x8xf32>
    %19 = vector.shape_cast %16 : vector<8x8xf32> to vector<1x1x8x8xf32>
    tpu.vector_store %arg4[%c0_19, %c2_20, %c0_21, %c0_22], %19 {strides = array<i32>} : memref<1x4x8x8xf32, #tpu.memory_space<vmem>>, vector<1x1x8x8xf32>,
    %c3 = arith.constant 3 : index
    %c0_23 = arith.constant 0 : index
    %c0_24 = arith.constant 0 : index
    %20 = vector.load %arg3[%c3, %c0_23, %c0_24] : memref<4x32x8xf32, #tpu.memory_space<vmem>>, vector<1x32x8xf32>
    %21 = vector.shape_cast %20 : vector<1x32x8xf32> to vector<32x8xf32>
    %cst_25 = arith.constant dense<0.000000e+00> : vector<8x8xf32>
    %22 = tpu.matmul %1, %21, %cst_25 {dimension_numbers = #tpu.dot_dimension_numbers<[1], [0], [0], [1], [0, 0, 1, 1], [], []>} : vector<8x32xf32>, vector<32x8xf32>, vector<8x8xf32> -> vector<8x8xf32>
    %c0_26 = arith.constant 0 : index
    %c3_27 = arith.constant 3 : index
    %c0_28 = arith.constant 0 : index
    %c0_29 = arith.constant 0 : index
    %23 = vector.load %arg4[%c0_26, %c3_27, %c0_28, %c0_29] : memref<1x4x8x8xf32, #tpu.memory_space<vmem>>, vector<1x1x8x8xf32>
    %24 = vector.shape_cast %23 : vector<1x1x8x8xf32> to vector<8x8xf32>
    %25 = vector.shape_cast %22 : vector<8x8xf32> to vector<1x1x8x8xf32>
    tpu.vector_store %arg4[%c0_26, %c3_27, %c0_28, %c0_29], %25 {strides = array<i32>} : memref<1x4x8x8xf32, #tpu.memory_space<vmem>>, vector<1x1x8x8xf32>,
    return
  }
  func.func @transform_0(%arg0: i32, %arg1: i32) -> (i32, i32, i32) {
    %c0_i32 = arith.constant 0 : i32
    %c0_i32_0 = arith.constant 0 : i32
    return %arg0, %arg1, %c0_i32 : i32, i32, i32
  }
  func.func @transform_1(%arg0: i32, %arg1: i32) -> (i32, i32, i32) {
    %c0_i32 = arith.constant 0 : i32
    %c0_i32_0 = arith.constant 0 : i32
    %c0_i32_1 = arith.constant 0 : i32
    %c0_i32_2 = arith.constant 0 : i32
    return %c0_i32, %c0_i32_0, %c0_i32_1 : i32, i32, i32
  }
  func.func @transform_2(%arg0: i32, %arg1: i32) -> (i32, i32, i32, i32) {
    %c0_i32 = arith.constant 0 : i32
    %c0_i32_0 = arith.constant 0 : i32
    %c0_i32_1 = arith.constant 0 : i32
    return %arg0, %c0_i32, %arg1, %c0_i32_0 : i32, i32, i32, i32
  }
}

</mosaic_0001>

<llo_original>
// kernel: tpu_custom_call.1
$region0: #{tpu_custom_call.1}
  #allocation0 [shape = 'u32[]', space=smem, size = 0x4, offset = 0x4, fixed_abs, tag = 'smem constant byte address 0x4 - core index']
  #allocation1 [shape = 'u32[144,128]{1,0:T(1,128)}', space=vmem, size = 0x12000, scoped, tag = 'internal scratch']
  %s0 = inlined_call_operand.hbm [shape: f32[2,8,32], index: 0, kind: input, shape index: {}]
  %s1 = inlined_call_operand.hbm [shape: f32[4,32,8], index: 1, kind: input, shape index: {}]
  %s2 = inlined_call_operand.hbm [shape: f32[2,4,8,8], index: 2, kind: output, shape index: {}]
  %s3 = sld [smem:[#allocation0]]
  $region49: #{tpu_custom_call.1} parent=0
    _
  %s5 = ssub.s32 1, %s3
  %s6 = scalar_select 0, %s5, %s3
  $region1: #{tpu_custom_call.1} parent=0
    #allocation2 [shape = 'u8[8192]{0}', space=vmem, size = 0x2000, scoped, tag = 'input window, operand 0']
    #allocation3 [shape = 's32[2]{0}', space=sflag, size = 0x8, scoped, tag = 'scoped memory for tpu_custom_call.1']
    #allocation4 [shape = 's32[2]{0}', space=sflag, size = 0x8, scoped, tag = 'scoped memory for tpu_custom_call.1']
    #allocation5 [shape = 'u8[65536]{0}', space=vmem, size = 0x10000, scoped, tag = 'input window, operand 1, single buffered']
    #allocation6 [shape = 's32[1]{0}', space=sflag, size = 0x4, scoped, tag = 'scoped memory for tpu_custom_call.1']
    #allocation7 [shape = 'u8[32768]{0}', space=vmem, size = 0x8000, scoped, tag = 'output window, operand 0']
    %7 = vsyncpa [#allocation3], 0
    %s8 = scalar_lea.sflag [#allocation3], 1
    %9 = vsyncpa %s8, 0
    %10 = vsyncpa [#allocation6], 0
    %11 = vsyncpa [#allocation4], 0
    %s12 = scalar_lea.sflag [#allocation4], 1
    %13 = vsyncpa %s12, 0
    loop: start=0, step=1, limit=4
    $region2: #{tpu_custom_call.1} parent=1 // loop_pre_header
      _
    $region3: #{tpu_custom_call.1} parent=1 // loop_header
      %s15 = sphi 0, %s19
      %p16 = scmp.ge.s32.totalorder %s15, 4
      %s22 = sphi 0, %s34
      %s23 = sphi 0, %s30
      %s24 = sphi 0, %s22
      %s25 = sphi 0, %s23
      %s26 = sphi 0, %s24
      %s27 = sphi 0, %s25
      %s39 = sphi 0, %s41
      %s42 = sphi 0, %s39
      %s43 = sphi 0, %s42
      %s59 = sphi 0, %s43
      %s63 = sphi 0, %s63
      %s65 = sphi 0, %s63
      %s66 = sphi 0, %s65
      %s80 = sphi 0, %s66
      %s88 = sphi 0, %s90
      %s91 = sphi 0, %s88
      %s92 = sphi 0, %s91
      %s108 = sphi 0, %s92
    $region4: #{tpu_custom_call.1} parent=1 // loop_header_branch
      %18 = sbr.rel (%p16) target = $region8
    $region5: #{tpu_custom_call.1} parent=1 // loop_body
      %s20 = ssub.s32 %s15, 1
      %s21 = ssub.s32 %s15, 2
      %s28 = sadd.s32 1, %s23
      %p29 = scmp.ge.s32.totalorder %s28, 1
      %s30 = scalar_select %p29, 0, %s28
      %s31 = sadd.s32 1, %s22
      %s32 = scalar_select %p29, %s31, %s22
      %p33 = scmp.ge.s32.totalorder %s32, 2
      %s34 = scalar_select %p33, 0, %s32
      %s35 = ssub.s32 %s22, %s34
      %s36 = ssub.s32 %s23, %s30
      %s37 = sor.u32 %s35, %s36
      %p38 = scmp.eq.s32.totalorder %s37, 0
      %s40 = sadd.s32 %s39, 1
      %s41 = scalar_select %p38, %s39, %s40
      %p44 = pneg %p38
      %p45 = scmp.eq.s32.totalorder %s15, 1
      %p46 = por %p44, %p45
      %p47 = scmp.ne.s32.totalorder %s39, %s42
      %p48 = scmp.eq.s32.totalorder %s15, 0
      %p49 = por %p47, %p48
      %p50 = scmp.ne.s32.totalorder %s39, %s42
      %p51 = scmp.eq.s32.totalorder %s20, 1
      %p52 = por %p50, %p51
      %p53 = scmp.ne.s32.totalorder %s42, %s43
      %p54 = scmp.eq.s32.totalorder %s20, 0
      %p55 = por %p53, %p54
      %p56 = scmp.ne.s32.totalorder %s42, %s43
      %p57 = scmp.eq.s32.totalorder %s21, 1
      %p58 = por %p56, %p57
      %p60 = scmp.ne.s32.totalorder %s43, %s59
      %p61 = scmp.eq.s32.totalorder %s21, 0
      %p62 = por %p60, %p61
      %s64 = sadd.s32 %s63, 1
      %p67 = scmp.eq.s32.totalorder %s15, 1
      %p68 = scmp.ne.s32.totalorder %s63, %s65
      %p69 = scmp.eq.s32.totalorder %s15, 0
      %p70 = por %p68, %p69
      %p71 = scmp.ne.s32.totalorder %s63, %s65
      %p72 = scmp.eq.s32.totalorder %s20, 1
      %p73 = por %p71, %p72
      %p74 = scmp.ne.s32.totalorder %s65, %s66
      %p75 = scmp.eq.s32.totalorder %s20, 0
      %p76 = por %p74, %p75
      %p77 = scmp.ne.s32.totalorder %s65, %s66
      %p78 = scmp.eq.s32.totalorder %s21, 1
      %p79 = por %p77, %p78
      %p81 = scmp.ne.s32.totalorder %s66, %s80
      %p82 = scmp.eq.s32.totalorder %s21, 0
      %p83 = por %p81, %p82
      %s84 = ssub.s32 %s22, %s34
      %s85 = ssub.s32 %s23, %s30
      %s86 = sor.u32 %s84, %s85
      %p87 = scmp.eq.s32.totalorder %s86, 0
      %s89 = sadd.s32 %s88, 1
      %s90 = scalar_select %p87, %s88, %s89
      %p93 = pneg %p87
      %p94 = scmp.eq.s32.totalorder %s15, 1
      %p95 = por %p93, %p94
      %p96 = scmp.ne.s32.totalorder %s88, %s91
      %p97 = scmp.eq.s32.totalorder %s15, 0
      %p98 = por %p96, %p97
      %p99 = scmp.ne.s32.totalorder %s88, %s91
      %p100 = scmp.eq.s32.totalorder %s20, 1
      %p101 = por %p99, %p100
      %p102 = scmp.ne.s32.totalorder %s91, %s92
      %p103 = scmp.eq.s32.totalorder %s20, 0
      %p104 = por %p102, %p103
      %p105 = scmp.ne.s32.totalorder %s91, %s92
      %p106 = scmp.eq.s32.totalorder %s21, 1
      %p107 = por %p105, %p106
      %p109 = scmp.ne.s32.totalorder %s92, %s108
      %p110 = scmp.eq.s32.totalorder %s21, 0
      %p111 = por %p109, %p110
      %p112 = scmp.le.s32.totalorder 1, %s15
      %p113 = scmp.lt.s32.totalorder %s15, 3
      %p114 = pnand %p112, %p113
      %p115 = pneg %p114
      // Predicated region
      $region9: #{tpu_custom_call.1} parent=5 // pred_check
        _
      $region10: #{tpu_custom_call.1} parent=5 // pred_check_branch
        %117 = sbr.rel (%p114) target = $region12
      $region11: #{tpu_custom_call.1} parent=5 // pred_region
        %s118 = ssub.s32 %s15, 1
        // Predicated region
        $region13: #{tpu_custom_call.1} parent=11 // pred_check
          %p119 = pneg %p76
        $region14: #{tpu_custom_call.1} parent=11 // pred_check_branch
          %121 = sbr.rel (%p119) target = $region16
        $region15: #{tpu_custom_call.1} parent=11 // pred_region
          %s123 = ssub.s32 2048, 2048
          %124 = vsyncadd [#allocation6], %s123
          %s125 = sshll.u32 [#allocation5], 4
          %s126 = int_to_ptr.vmem [resolvable:$true] %s125
          %131 = dma.hbm_to_vmem [thread:$0]  %s1, 2048, %s126, [#allocation6], 128, 128, 8
        $region16: #{tpu_custom_call.1} parent=11 // pred_fallthru
          _
      $region12: #{tpu_custom_call.1} parent=5 // pred_fallthru
        _
      %p132 = scmp.lt.s32.totalorder %s15, 2
      // Predicated region
      $region17: #{tpu_custom_call.1} parent=5 // pred_check
        %p133 = pneg %p132
      $region18: #{tpu_custom_call.1} parent=5 // pred_check_branch
        %135 = sbr.rel (%p133) target = $region20
      $region19: #{tpu_custom_call.1} parent=5 // pred_region
        // Predicated region
        $region21: #{tpu_custom_call.1} parent=19 // pred_check
          %p136 = pneg %p49
        $region22: #{tpu_custom_call.1} parent=19 // pred_check_branch
          %138 = sbr.rel (%p136) target = $region24
        $region23: #{tpu_custom_call.1} parent=19 // pred_region
          %s139 = sand.u32 %s39, 1
          %s140 = scalar_lea.sflag [#allocation3], %s139
          %s141 = sand.u32 %s39, 1
          %s142 = smul.addr %s141, 8
          %s143 = scalar_lea.vmem [#allocation2], %s142
          %s145 = ssub.s32 128, 128
          %146 = vsyncadd %s140, %s145
          %s147 = sadd.s32 %s23, %s22
          %s148 = smul.addr %s147, 128
          %s149 = scalar_lea.hbm %s0, %s148
          %s151 = sshll.u32 %s143, 4
          %s152 = int_to_ptr.vmem [resolvable:$true] %s151
          %154 = dma.hbm_to_vmem [thread:$0]  %s149, 128, %s152, %s140
        $region24: #{tpu_custom_call.1} parent=19 // pred_fallthru
          _
      $region20: #{tpu_custom_call.1} parent=5 // pred_fallthru
        _
      %p155 = scmp.le.s32.totalorder 1, %s15
      %p156 = scmp.lt.s32.totalorder %s15, 3
      %p157 = pnand %p155, %p156
      %p158 = pneg %p157
      // Predicated region
      $region25: #{tpu_custom_call.1} parent=5 // pred_check
        _
      $region26: #{tpu_custom_call.1} parent=5 // pred_check_branch
        %160 = sbr.rel (%p157) target = $region28
      $region27: #{tpu_custom_call.1} parent=5 // pred_region
        %s161 = ssub.s32 %s15, 1
        %s162 = sand.u32 %s42, 1
        %s163 = scalar_lea.sflag [#allocation3], %s162
        %s164 = sand.u32 %s42, 1
        %s165 = smul.addr %s164, 8
        %s166 = scalar_lea.vmem [#allocation2], %s165
        // Predicated region
        $region29: #{tpu_custom_call.1} parent=27 // pred_check
          %p167 = pneg %p55
        $region30: #{tpu_custom_call.1} parent=27 // pred_check_branch
          %169 = sbr.rel (%p167) target = $region32
        $region31: #{tpu_custom_call.1} parent=27 // pred_region
          %170 = dma.done %s163, 128
        $region32: #{tpu_custom_call.1} parent=27 // pred_fallthru
          _
        // Predicated region
        $region33: #{tpu_custom_call.1} parent=27 // pred_check
          %p171 = pneg %p76
        $region34: #{tpu_custom_call.1} parent=27 // pred_check_branch
          %173 = sbr.rel (%p171) target = $region36
        $region35: #{tpu_custom_call.1} parent=27 // pred_region
          %174 = dma.done [#allocation6], 2048
        $region36: #{tpu_custom_call.1} parent=27 // pred_fallthru
          _
        %s175 = sand.u32 %s42, 1
        %s176 = scalar_lea.sflag [#allocation3], %s175
        %s177 = sand.u32 %s42, 1
        %s178 = smul.addr %s177, 8
        %s179 = scalar_lea.vmem [#allocation2], %s178
        %p180 = pneg %p55
        %p181 = pneg %p52
        %p182 = pneg %p76
        %p183 = pneg %p73
        %p184 = pneg %p104
        %p185 = pneg %p101
        %s186 = sand.u32 %s91, 1
        %s187 = scalar_lea.sflag [#allocation4], %s186
        %s188 = sand.u32 %s91, 1
        %s189 = smul.addr %s188, 32
        %s190 = scalar_lea.vmem [#allocation7], %s189
        %v191 = vld [vmem:[%s166] sm:$0xff]
        %v192 = vld [vmem:[#allocation5] sm:$0xff]
        %v193 = vld [vmem:[#allocation5 + $0x8] sm:$0xff]
        %v194 = vld [vmem:[#allocation5 + $0x10] sm:$0xff]
        %v195 = vld [vmem:[#allocation5 + $0x18] sm:$0xff]
        %vm196 = vcmask 261120
        %v198 = vsel %vm196, %v191, 0
        %200 = vmatprep.subr.mxu0 0.0
        %201 = vmatpush1.msra.mxu0 %v192
        %202 = vmatprep.subr.mxu0 0.0
        %203 = vmatpush1.msra.mxu0 %v193
        %204 = vmatprep.subr.mxu0 0.0
        %205 = vmatpush1.msra.mxu0 %v194
        %206 = vmatprep.subr.mxu0 0.0
        %207 = vmatpush1.msra.mxu0 %v195
        %208 = vmatprep.subr.mxu0 0.0
        %209 = vmatpush1.msra.mxu0 0.0
        %210 = vmatprep.subr.mxu0 0.0
        %211 = vmatpush1.msra.mxu0 0.0
        %212 = vmatprep.subr.mxu0 0.0
        %213 = vmatpush1.msra.mxu0 0.0
        %214 = vmatprep.subr.mxu0 0.0
        %215 = vmatpush1.msra.mxu0 0.0
        %216 = vmatprep.subr.mxu0 0.0
        %217 = vmatpush1.msra.mxu0 0.0
        %218 = vmatprep.subr.mxu0 0.0
        %219 = vmatpush1.msra.mxu0 0.0
        %220 = vmatprep.subr.mxu0 0.0
        %221 = vmatpush1.msra.mxu0 0.0
        %222 = vmatprep.subr.mxu0 0.0
        %223 = vmatpush1.msra.mxu0 0.0
        %224 = vmatprep.subr.mxu0 0.0
        %225 = vmatpush1.msra.mxu0 0.0
        %226 = vmatprep.subr.mxu0 0.0
        %227 = vmatpush1.msra.mxu0 0.0
        %228 = vmatprep.subr.mxu0 0.0
        %229 = vmatpush1.msra.mxu0 0.0
        %230 = vmatprep.subr.mxu0 0.0
        %231 = vmatpush1.msra.mxu0 0.0
        %232 = vmatprep.subr.mxu0 0.0
        %233 = vmatpush1.msra.mxu0 0.0
        %234 = vmatprep.subr.mxu0 0.0
        %235 = vmatpush1.msra.mxu0 0.0
        %236 = vmatprep.subr.mxu0 0.0
        %237 = vmatpush1.msra.mxu0 0.0
        %238 = vmatprep.subr.mxu0 0.0
        %239 = vmatpush1.msra.mxu0 0.0
        %240 = vmatprep.subr.mxu0 0.0
        %241 = vmatpush1.msra.mxu0 0.0
        %242 = vmatprep.subr.mxu0 0.0
        %243 = vmatpush1.msra.mxu0 0.0
        %244 = vmatprep.subr.mxu0 0.0
        %245 = vmatpush1.msra.mxu0 0.0
        %246 = vmatprep.subr.mxu0 0.0
        %247 = vmatpush1.msra.mxu0 0.0
        %248 = vmatprep.subr.mxu0 0.0
        %249 = vmatpush1.msra.mxu0 0.0
        %250 = vmatprep.subr.mxu0 0.0
        %251 = vmatpush1.msra.mxu0 0.0
        %252 = vmatprep.subr.mxu0 0.0
        %253 = vmatpush1.msra.mxu0 0.0
        %254 = vmatprep.subr.mxu0 0.0
        %255 = vmatpush1.msra.mxu0 0.0
        %256 = vmatprep.subr.mxu0 0.0
        %257 = vmatpush1.msra.mxu0 0.0
        %258 = vmatprep.subr.mxu0 0.0
        %259 = vmatpush1.msra.mxu0 0.0
        %260 = vmatprep.subr.mxu0 0.0
        %261 = vmatpush1.msra.mxu0 0.0
        %262 = vmatprep.subr.mxu0 0.0
        %263 = vmatpush1.msra.mxu0 0.0
        %264 = vmatprep.mubr.f32.mxu0 0.0
        %265 = vmatmul.mubr.f32.gmra.mrb[0].mxu0 %v198
        %v266 = vpop.f32.mrb[0].mxu0
        %v267 = vadd.f32 0.0, %v266
        %v268 = vpop.f32.mrb[0].mxu0
        %269 = vdwg.mxu0
        %vm270 = vcmask 64512
        %271 = vst.msk [vmem:[%s190] sm:$0xff] %vm270, %v267
        %s272 = scalar_lea.vmem [#allocation5], 32
        %v273 = vld [vmem:[%s272] sm:$0xff]
        %v274 = vld [vmem:[%s272 + $0x8] sm:$0xff]
        %v275 = vld [vmem:[%s272 + $0x10] sm:$0xff]
        %v276 = vld [vmem:[%s272 + $0x18] sm:$0xff]
        %277 = vmatprep.subr.mxu0 0.0
        %278 = vmatpush1.msra.mxu0 %v273
        %279 = vmatprep.subr.mxu0 0.0
        %280 = vmatpush1.msra.mxu0 %v274
        %281 = vmatprep.subr.mxu0 0.0
        %282 = vmatpush1.msra.mxu0 %v275
        %283 = vmatprep.subr.mxu0 0.0
        %284 = vmatpush1.msra.mxu0 %v276
        %285 = vmatprep.subr.mxu0 0.0
        %286 = vmatpush1.msra.mxu0 0.0
        %287 = vmatprep.subr.mxu0 0.0
        %288 = vmatpush1.msra.mxu0 0.0
        %289 = vmatprep.subr.mxu0 0.0
        %290 = vmatpush1.msra.mxu0 0.0
        %291 = vmatprep.subr.mxu0 0.0
        %292 = vmatpush1.msra.mxu0 0.0
        %293 = vmatprep.subr.mxu0 0.0
        %294 = vmatpush1.msra.mxu0 0.0
        %295 = vmatprep.subr.mxu0 0.0
        %296 = vmatpush1.msra.mxu0 0.0
        %297 = vmatprep.subr.mxu0 0.0
        %298 = vmatpush1.msra.mxu0 0.0
        %299 = vmatprep.subr.mxu0 0.0
        %300 = vmatpush1.msra.mxu0 0.0
        %301 = vmatprep.subr.mxu0 0.0
        %302 = vmatpush1.msra.mxu0 0.0
        %303 = vmatprep.subr.mxu0 0.0
        %304 = vmatpush1.msra.mxu0 0.0
        %305 = vmatprep.subr.mxu0 0.0
        %306 = vmatpush1.msra.mxu0 0.0
        %307 = vmatprep.subr.mxu0 0.0
        %308 = vmatpush1.msra.mxu0 0.0
        %309 = vmatprep.subr.mxu0 0.0
        %310 = vmatpush1.msra.mxu0 0.0
        %311 = vmatprep.subr.mxu0 0.0
        %312 = vmatpush1.msra.mxu0 0.0
        %313 = vmatprep.subr.mxu0 0.0
        %314 = vmatpush1.msra.mxu0 0.0
        %315 = vmatprep.subr.mxu0 0.0
        %316 = vmatpush1.msra.mxu0 0.0
        %317 = vmatprep.subr.mxu0 0.0
        %318 = vmatpush1.msra.mxu0 0.0
        %319 = vmatprep.subr.mxu0 0.0
        %320 = vmatpush1.msra.mxu0 0.0
        %321 = vmatprep.subr.mxu0 0.0
        %322 = vmatpush1.msra.mxu0 0.0
        %323 = vmatprep.subr.mxu0 0.0
        %324 = vmatpush1.msra.mxu0 0.0
        %325 = vmatprep.subr.mxu0 0.0
        %326 = vmatpush1.msra.mxu0 0.0
        %327 = vmatprep.subr.mxu0 0.0
        %328 = vmatpush1.msra.mxu0 0.0
        %329 = vmatprep.subr.mxu0 0.0
        %330 = vmatpush1.msra.mxu0 0.0
        %331 = vmatprep.subr.mxu0 0.0
        %332 = vmatpush1.msra.mxu0 0.0
        %333 = vmatprep.subr.mxu0 0.0
        %334 = vmatpush1.msra.mxu0 0.0
        %335 = vmatprep.subr.mxu0 0.0
        %336 = vmatpush1.msra.mxu0 0.0
        %337 = vmatprep.subr.mxu0 0.0
        %338 = vmatpush1.msra.mxu0 0.0
        %339 = vmatprep.subr.mxu0 0.0
        %340 = vmatpush1.msra.mxu0 0.0
        %341 = vmatprep.mubr.f32.mxu0 0.0
        %342 = vmatmul.mubr.f32.gmra.mrb[0].mxu0 %v198
        %v343 = vpop.f32.mrb[0].mxu0
        %v344 = vadd.f32 0.0, %v343
        %v345 = vpop.f32.mrb[0].mxu0
        %346 = vdwg.mxu0
        %s347 = scalar_lea.vmem %s190, 8 [#allocation7]
        %348 = vst.msk [vmem:[%s347] sm:$0xff] %vm270, %v344
        %s349 = scalar_lea.vmem [#allocation5], 64
        %v350 = vld [vmem:[%s349] sm:$0xff]
        %v351 = vld [vmem:[%s349 + $0x8] sm:$0xff]
        %v352 = vld [vmem:[%s349 + $0x10] sm:$0xff]
        %v353 = vld [vmem:[%s349 + $0x18] sm:$0xff]
        %354 = vmatprep.subr.mxu0 0.0
        %355 = vmatpush1.msra.mxu0 %v350
        %356 = vmatprep.subr.mxu0 0.0
        %357 = vmatpush1.msra.mxu0 %v351
        %358 = vmatprep.subr.mxu0 0.0
        %359 = vmatpush1.msra.mxu0 %v352
        %360 = vmatprep.subr.mxu0 0.0
        %361 = vmatpush1.msra.mxu0 %v353
        %362 = vmatprep.subr.mxu0 0.0
        %363 = vmatpush1.msra.mxu0 0.0
        %364 = vmatprep.subr.mxu0 0.0
        %365 = vmatpush1.msra.mxu0 0.0
        %366 = vmatprep.subr.mxu0 0.0
        %367 = vmatpush1.msra.mxu0 0.0
        %368 = vmatprep.subr.mxu0 0.0
        %369 = vmatpush1.msra.mxu0 0.0
        %370 = vmatprep.subr.mxu0 0.0
        %371 = vmatpush1.msra.mxu0 0.0
        %372 = vmatprep.subr.mxu0 0.0
        %373 = vmatpush1.msra.mxu0 0.0
        %374 = vmatprep.subr.mxu0 0.0
        %375 = vmatpush1.msra.mxu0 0.0
        %376 = vmatprep.subr.mxu0 0.0
        %377 = vmatpush1.msra.mxu0 0.0
        %378 = vmatprep.subr.mxu0 0.0
        %379 = vmatpush1.msra.mxu0 0.0
        %380 = vmatprep.subr.mxu0 0.0
        %381 = vmatpush1.msra.mxu0 0.0
        %382 = vmatprep.subr.mxu0 0.0
        %383 = vmatpush1.msra.mxu0 0.0
        %384 = vmatprep.subr.mxu0 0.0
        %385 = vmatpush1.msra.mxu0 0.0
        %386 = vmatprep.subr.mxu0 0.0
        %387 = vmatpush1.msra.mxu0 0.0
        %388 = vmatprep.subr.mxu0 0.0
        %389 = vmatpush1.msra.mxu0 0.0
        %390 = vmatprep.subr.mxu0 0.0
        %391 = vmatpush1.msra.mxu0 0.0
        %392 = vmatprep.subr.mxu0 0.0
        %393 = vmatpush1.msra.mxu0 0.0
        %394 = vmatprep.subr.mxu0 0.0
        %395 = vmatpush1.msra.mxu0 0.0
        %396 = vmatprep.subr.mxu0 0.0
        %397 = vmatpush1.msra.mxu0 0.0
        %398 = vmatprep.subr.mxu0 0.0
        %399 = vmatpush1.msra.mxu0 0.0
        %400 = vmatprep.subr.mxu0 0.0
        %401 = vmatpush1.msra.mxu0 0.0
        %402 = vmatprep.subr.mxu0 0.0
        %403 = vmatpush1.msra.mxu0 0.0
        %404 = vmatprep.subr.mxu0 0.0
        %405 = vmatpush1.msra.mxu0 0.0
        %406 = vmatprep.subr.mxu0 0.0
        %407 = vmatpush1.msra.mxu0 0.0
        %408 = vmatprep.subr.mxu0 0.0
        %409 = vmatpush1.msra.mxu0 0.0
        %410 = vmatprep.subr.mxu0 0.0
        %411 = vmatpush1.msra.mxu0 0.0
        %412 = vmatprep.subr.mxu0 0.0
        %413 = vmatpush1.msra.mxu0 0.0
        %414 = vmatprep.subr.mxu0 0.0
        %415 = vmatpush1.msra.mxu0 0.0
        %416 = vmatprep.subr.mxu0 0.0
        %417 = vmatpush1.msra.mxu0 0.0
        %418 = vmatprep.mubr.f32.mxu0 0.0
        %419 = vmatmul.mubr.f32.gmra.mrb[0].mxu0 %v198
        %v420 = vpop.f32.mrb[0].mxu0
        %v421 = vadd.f32 0.0, %v420
        %v422 = vpop.f32.mrb[0].mxu0
        %423 = vdwg.mxu0
        %s424 = scalar_lea.vmem %s190, 16 [#allocation7]
        %425 = vst.msk [vmem:[%s424] sm:$0xff] %vm270, %v421
        %s426 = scalar_lea.vmem [#allocation5], 96
        %v427 = vld [vmem:[%s426] sm:$0xff]
        %v428 = vld [vmem:[%s426 + $0x8] sm:$0xff]
        %v429 = vld [vmem:[%s426 + $0x10] sm:$0xff]
        %v430 = vld [vmem:[%s426 + $0x18] sm:$0xff]
        %431 = vmatprep.subr.mxu0 0.0
        %432 = vmatpush1.msra.mxu0 %v427
        %433 = vmatprep.subr.mxu0 0.0
        %434 = vmatpush1.msra.mxu0 %v428
        %435 = vmatprep.subr.mxu0 0.0
        %436 = vmatpush1.msra.mxu0 %v429
        %437 = vmatprep.subr.mxu0 0.0
        %438 = vmatpush1.msra.mxu0 %v430
        %439 = vmatprep.subr.mxu0 0.0
        %440 = vmatpush1.msra.mxu0 0.0
        %441 = vmatprep.subr.mxu0 0.0
        %442 = vmatpush1.msra.mxu0 0.0
        %443 = vmatprep.subr.mxu0 0.0
        %444 = vmatpush1.msra.mxu0 0.0
        %445 = vmatprep.subr.mxu0 0.0
        %446 = vmatpush1.msra.mxu0 0.0
        %447 = vmatprep.subr.mxu0 0.0
        %448 = vmatpush1.msra.mxu0 0.0
        %449 = vmatprep.subr.mxu0 0.0
        %450 = vmatpush1.msra.mxu0 0.0
        %451 = vmatprep.subr.mxu0 0.0
        %452 = vmatpush1.msra.mxu0 0.0
        %453 = vmatprep.subr.mxu0 0.0
        %454 = vmatpush1.msra.mxu0 0.0
        %455 = vmatprep.subr.mxu0 0.0
        %456 = vmatpush1.msra.mxu0 0.0
        %457 = vmatprep.subr.mxu0 0.0
        %458 = vmatpush1.msra.mxu0 0.0
        %459 = vmatprep.subr.mxu0 0.0
        %460 = vmatpush1.msra.mxu0 0.0
        %461 = vmatprep.subr.mxu0 0.0
        %462 = vmatpush1.msra.mxu0 0.0
        %463 = vmatprep.subr.mxu0 0.0
        %464 = vmatpush1.msra.mxu0 0.0
        %465 = vmatprep.subr.mxu0 0.0
        %466 = vmatpush1.msra.mxu0 0.0
        %467 = vmatprep.subr.mxu0 0.0
        %468 = vmatpush1.msra.mxu0 0.0
        %469 = vmatprep.subr.mxu0 0.0
        %470 = vmatpush1.msra.mxu0 0.0
        %471 = vmatprep.subr.mxu0 0.0
        %472 = vmatpush1.msra.mxu0 0.0
        %473 = vmatprep.subr.mxu0 0.0
        %474 = vmatpush1.msra.mxu0 0.0
        %475 = vmatprep.subr.mxu0 0.0
        %476 = vmatpush1.msra.mxu0 0.0
        %477 = vmatprep.subr.mxu0 0.0
        %478 = vmatpush1.msra.mxu0 0.0
        %479 = vmatprep.subr.mxu0 0.0
        %480 = vmatpush1.msra.mxu0 0.0
        %481 = vmatprep.subr.mxu0 0.0
        %482 = vmatpush1.msra.mxu0 0.0
        %483 = vmatprep.subr.mxu0 0.0
        %484 = vmatpush1.msra.mxu0 0.0
        %485 = vmatprep.subr.mxu0 0.0
        %486 = vmatpush1.msra.mxu0 0.0
        %487 = vmatprep.subr.mxu0 0.0
        %488 = vmatpush1.msra.mxu0 0.0
        %489 = vmatprep.subr.mxu0 0.0
        %490 = vmatpush1.msra.mxu0 0.0
        %491 = vmatprep.subr.mxu0 0.0
        %492 = vmatpush1.msra.mxu0 0.0
        %493 = vmatprep.subr.mxu0 0.0
        %494 = vmatpush1.msra.mxu0 0.0
        %495 = vmatprep.mubr.f32.mxu0 0.0
        %496 = vmatmul.mubr.f32.gmra.mrb[0].mxu0 %v198
        %v497 = vpop.f32.mrb[0].mxu0
        %v498 = vadd.f32 0.0, %v497
        %v499 = vpop.f32.mrb[0].mxu0
        %500 = vdwg.mxu0
        %s501 = scalar_lea.vmem %s190, 24 [#allocation7]
        %502 = vst.msk [vmem:[%s501] sm:$0xff] %vm270, %v498
        %s503 = sand.u32 %s91, 1
        %s504 = scalar_lea.sflag [#allocation4], %s503
        %s505 = sand.u32 %s91, 1
        %s506 = smul.addr %s505, 32
        %s507 = scalar_lea.vmem [#allocation7], %s506
        // Predicated region
        $region37: #{tpu_custom_call.1} parent=27 // pred_check
          %p508 = pneg %p101
        $region38: #{tpu_custom_call.1} parent=27 // pred_check_branch
          %510 = sbr.rel (%p508) target = $region40
        $region39: #{tpu_custom_call.1} parent=27 // pred_region
          %s512 = ssub.s32 512, 512
          %513 = vsyncadd %s504, %s512
          %s514 = smul.addr %s24, 4
          %s515 = sadd.s32 %s25, %s514
          %s516 = smul.addr %s515, 128
          %s517 = scalar_lea.hbm %s2, %s516
          %s518 = sshll.u32 %s507, 4
          %s519 = int_to_ptr.vmem [resolvable:$true] %s518
          %524 = dma.vmem_to_hbm [thread:$0]  %s519, 512, %s517, %s504, 128, 128, 8
        $region40: #{tpu_custom_call.1} parent=27 // pred_fallthru
          _
      $region28: #{tpu_custom_call.1} parent=5 // pred_fallthru
        _
      %p525 = scmp.le.s32.totalorder 2, %s15
      // Predicated region
      $region41: #{tpu_custom_call.1} parent=5 // pred_check
        %p526 = pneg %p525
      $region42: #{tpu_custom_call.1} parent=5 // pred_check_branch
        %528 = sbr.rel (%p526) target = $region44
      $region43: #{tpu_custom_call.1} parent=5 // pred_region
        %s529 = ssub.s32 %s15, 2
        // Predicated region
        $region45: #{tpu_custom_call.1} parent=43 // pred_check
          %p530 = pneg %p107
        $region46: #{tpu_custom_call.1} parent=43 // pred_check_branch
          %532 = sbr.rel (%p530) target = $region48
        $region47: #{tpu_custom_call.1} parent=43 // pred_region
          %s533 = sand.u32 %s92, 1
          %s534 = scalar_lea.sflag [#allocation4], %s533
          %s535 = sand.u32 %s92, 1
          %s536 = smul.addr %s535, 32
          %s537 = scalar_lea.vmem [#allocation7], %s536
          %538 = dma.done %s534, 512
        $region48: #{tpu_custom_call.1} parent=43 // pred_fallthru
          _
      $region44: #{tpu_custom_call.1} parent=5 // pred_fallthru
        _
    $region6: #{tpu_custom_call.1} parent=1 // loop_footer
      %s19 = sadd.s32 1, %s15
    $region7: #{tpu_custom_call.1} parent=1 // loop_footer_branch
      %14 = sbr.rel target = $region3
    $region8: #{tpu_custom_call.1} parent=1 // loop_exit
      _
    %539 = vsyncpa [#allocation3], 1
    %s540 = scalar_lea.sflag [#allocation3], 1
    %541 = vsyncpa %s540, 1
    %542 = vsyncpa [#allocation6], 1
    %543 = vsyncpa [#allocation4], 1
    %s544 = scalar_lea.sflag [#allocation4], 1
    %545 = vsyncpa %s544, 1

</llo_original>
